<compile_context>
chip_gen: v7x
topology: tpu7x:2x2x1
jax: 0.10.0
libtpu: 0.0.40
codegen_flags: <defaults>
</compile_context>

<pallas_src>
import jax
import jax.numpy as jnp
from jax.experimental import pallas as pl
from jax.experimental.pallas import tpu as pltpu


def _sigmoid_kernel(x_ref, o_ref):
    # sigmoid(x) = 0.5 * tanh(0.5 * x) + 0.5 — single EUP transcendental per vreg.
    x = x_ref[...]
    o_ref[...] = 0.5 * jnp.tanh(0.5 * x) + 0.5


@jax.jit
def sigmoid_pallas(x_nchw: jax.Array) -> jax.Array:
    n, c, h, w = x_nchw.shape
    total = n * c * h * w

    # Pack into a sublane-dense, lane-aligned (rows, 128) slab so the whole
    # tensor occupies ceil(total/1024) vregs and all stores are unmasked vst.
    lanes = 128
    padded = ((total + lanes - 1) // lanes) * lanes
    flat = x_nchw.reshape(-1)
    if padded != total:
        flat = jnp.pad(flat, (0, padded - total))
    rows = padded // lanes
    x2d = flat.reshape(rows, lanes)

    out2d = pl.pallas_call(
        _sigmoid_kernel,
        out_shape=jax.ShapeDtypeStruct((rows, lanes), x2d.dtype),
        in_specs=[pl.BlockSpec(memory_space=pltpu.MemorySpace.VMEM)],
        out_specs=pl.BlockSpec(memory_space=pltpu.MemorySpace.VMEM),
        cost_estimate=pl.CostEstimate(
            flops=3 * padded,
            transcendentals=padded,
            bytes_accessed=2 * padded * x2d.dtype.itemsize,
        ),
    )(x2d)

    out_flat = out2d.reshape(-1)
    if padded != total:
        out_flat = out_flat[:total]
    return out_flat.reshape(n, c, h, w)


if __name__ == "__main__":
    key = jax.random.PRNGKey(0)
    # Same shape as the PyTorch module's input: [1, 2304, 1, 1]
    x = jax.random.normal(key, (1, 2304, 1, 1), dtype=jnp.float32)

    # Plain JAX reference (computed first, independent of the kernel call).
    ref = jax.nn.sigmoid(x)

    out = sigmoid_pallas(x)
    jax.block_until_ready(out)

    assert out.shape == (1, 2304, 1, 1)
    assert jnp.allclose(out, ref, atol=1e-6, rtol=1e-6)

    print("KERNEL_OK")
</pallas_src>

<mosaic_0001>
module attributes {stable_mosaic.version = 11 : i64} {
  func.func @_sigmoid_kernel(%arg0: memref<18x128xf32, #tpu.memory_space<vmem>>, %arg1: memref<18x128xf32, #tpu.memory_space<vmem>>) attributes {dimension_semantics = [], scalar_prefetch = 0 : i64, scratch_operands = 0 : i64, tpu.core_type = #tpu.core_type<tc>} {
    %c0 = arith.constant 0 : index
    %c0_0 = arith.constant 0 : index
    %0 = vector.load %arg0[%c0, %c0_0] : memref<18x128xf32, #tpu.memory_space<vmem>>, vector<18x128xf32>
    %cst = arith.constant 5.000000e-01 : f32
    %1 = vector.broadcast %cst : f32 to vector<18x128xf32>
    %2 = arith.mulf %1, %0 : vector<18x128xf32>
    %3 = math.tanh %2 : vector<18x128xf32>
    %cst_1 = arith.constant 5.000000e-01 : f32
    %4 = vector.broadcast %cst_1 : f32 to vector<18x128xf32>
    %5 = arith.mulf %4, %3 : vector<18x128xf32>
    %cst_2 = arith.constant 5.000000e-01 : f32
    %6 = vector.broadcast %cst_2 : f32 to vector<18x128xf32>
    %7 = arith.addf %5, %6 : vector<18x128xf32>
    %c0_3 = arith.constant 0 : index
    %c0_4 = arith.constant 0 : index
    %8 = vector.load %arg1[%c0_3, %c0_4] : memref<18x128xf32, #tpu.memory_space<vmem>>, vector<18x128xf32>
    tpu.vector_store %arg1[%c0_3, %c0_4], %7 {strides = array<i32>} : memref<18x128xf32, #tpu.memory_space<vmem>>, vector<18x128xf32>,
    return
  }
}

</mosaic_0001>

<llo_original>
// kernel: sigmoid_pallas.1
$region0: #{sigmoid_pallas.1}
  #allocation0 [shape = 'u32[]', space=smem, size = 0x4, offset = 0x4, fixed_abs, tag = 'smem constant byte address 0x4 - core index']
  #allocation1 [shape = 'u32[144,128]{1,0:T(1,128)}', space=vmem, size = 0x12000, scoped, tag = 'internal scratch']
  %s0 = inlined_call_operand.vmem [shape: f32[18,128], index: 0, kind: input, shape index: {}]
  %s1 = inlined_call_operand.vmem [shape: f32[18,128], index: 1, kind: output, shape index: {}]
  %s2 = sld [smem:[#allocation0]]
  $region14: #{sigmoid_pallas.1} parent=0
    _
  %s4 = ssub.s32 1, %s2
  %s5 = scalar_select 0, %s4, %s2
  // Predicated region
  $region2: #{sigmoid_pallas.1} parent=0 // pred_check
    _
  $region3: #{sigmoid_pallas.1} parent=0 // pred_check_branch
    %7 = sbr.rel (0) target = $region5
  $region4: #{sigmoid_pallas.1} parent=0 // pred_region
    _
  $region5: #{sigmoid_pallas.1} parent=0 // pred_fallthru
    _
  %v8 = vld [vmem:[%s0] sm:$0xff]
  %v9 = vld [vmem:[%s0 + $0x8] sm:$0xff]
  %v10 = vld [vmem:[%s0 + $0x10] sm:$0x3]
  %v11 = vmul.f32 %v8, 0.5
  %v12 = vmul.f32 %v9, 0.5
  %v13 = vmul.f32 %v10, 0.5
  %v14 = vtanh.pop %v11
  %v15 = vtanh.pop %v12
  %v16 = vtanh.pop %v13
  %v17 = vmul.f32 %v14, 0.5
  %v18 = vmul.f32 %v15, 0.5
  %v19 = vmul.f32 %v16, 0.5
  %v20 = vadd.f32 %v17, 0.5
  %v21 = vadd.f32 %v18, 0.5
  %v22 = vadd.f32 %v19, 0.5
  %23 = vst [vmem:[%s1] sm:$0xff] %v20
  %24 = vst [vmem:[%s1 + $0x8] sm:$0xff] %v21
  %25 = vst [vmem:[%s1 + $0x10] sm:$0x3] %v22
  // Predicated region
  $region6: #{sigmoid_pallas.1} parent=0 // pred_check
    _
  $region7: #{sigmoid_pallas.1} parent=0 // pred_check_branch
    %27 = sbr.rel (0) target = $region9
  $region8: #{sigmoid_pallas.1} parent=0 // pred_region
    _
  $region9: #{sigmoid_pallas.1} parent=0 // pred_fallthru
    _
  // Predicated region
  $region10: #{sigmoid_pallas.1} parent=0 // pred_check
    _
  $region11: #{sigmoid_pallas.1} parent=0 // pred_check_branch
    %29 = sbr.rel (0) target = $region13
  $region12: #{sigmoid_pallas.1} parent=0 // pred_region
    _
  $region13: #{sigmoid_pallas.1} parent=0 // pred_fallthru
    _

</llo_original>
